<compile_context>
chip_gen: v6e
topology: v6e:2x2x1
jax: 0.10.0
libtpu: 0.0.40
codegen_flags: <defaults>
</compile_context>

<pallas_src>
import math
import functools

import jax
import jax.numpy as jnp
from jax import lax
from jax.experimental import pallas as pl
from jax.experimental.pallas import tpu as pltpu


_INV_SQRT2 = 1.0 / math.sqrt(2.0)

_MIB = 1024 * 1024
_RESIDENT_BUDGET = 40 * _MIB   # footprint threshold to enable the weights-resident path
_CHUNK_BUDGET = 44 * _MIB      # footprint target for the chunked path (shrink tiles above)
_VMEM_FLOOR = 32 * _MIB        # v5e default scoped VMEM is only 16 MiB -> explicit raise
_VMEM_CAP = 56 * _MIB          # leave headroom below v7x's 64 MiB physical VMEM


def _gelu(x, approximate):
    if approximate:
        # tanh approximation: dispatched to the EUP (free bundle slot behind the MXU).
        c = math.sqrt(2.0 / math.pi)
        return 0.5 * x * (1.0 + jnp.tanh(c * (x + 0.044715 * x * x * x)))
    # Original BERT gelu (module default): x * 0.5 * (1 + erf(x / sqrt(2)))
    return x * 0.5 * (1.0 + lax.erf(x * _INV_SQRT2))


def _round_up(n, m):
    return ((n + m - 1) // m) * m


# ---------------------------------------------------------------------------
# Kernels
# ---------------------------------------------------------------------------

def _mlp_kernel_resident(x_ref, w1_ref, b1_ref, w2_ref, b2_ref, o_ref, *, approx_gelu):
    # Weights are resident (constant block index); single pass per token tile.
    h = jnp.dot(x_ref[...], w1_ref[...], preferred_element_type=jnp.float32)
    h = _gelu(h + b1_ref[...], approx_gelu)
    # dropout(p=0.0) -> identity
    o = jnp.dot(h.astype(w2_ref.dtype), w2_ref[...], preferred_element_type=jnp.float32)
    o_ref[...] = (o + b2_ref[...]).astype(o_ref.dtype)
    # dropout(p=0.0) -> identity


def _mlp_kernel_chunked_f32out(x_ref, w1_ref, b1_ref, w2_ref, b2_ref, o_ref, *, approx_gelu):
    # f32 output: accumulate fc2 partials directly into the resident output block.
    k = pl.program_id(1)

    @pl.when(k == 0)
    def _():
        o_ref[...] = jnp.zeros_like(o_ref)

    h = jnp.dot(x_ref[...], w1_ref[...], preferred_element_type=jnp.float32)
    h = _gelu(h + b1_ref[...], approx_gelu)
    # dropout(p=0.0) -> identity
    o_ref[...] += jnp.dot(h.astype(w2_ref.dtype), w2_ref[...],
                          preferred_element_type=jnp.float32)

    @pl.when(k == pl.num_programs(1) - 1)
    def _():
        o_ref[...] += b2_ref[...]
        # dropout(p=0.0) -> identity


def _mlp_kernel_chunked_scratch(x_ref, w1_ref, b1_ref, w2_ref, b2_ref, o_ref, acc_ref, *,
                                approx_gelu):
    # Narrow (e.g. bf16) output: accumulate in an f32 VMEM scratch, cast on finalize.
    k = pl.program_id(1)

    @pl.when(k == 0)
    def _():
        acc_ref[...] = jnp.zeros_like(acc_ref)

    h = jnp.dot(x_ref[...], w1_ref[...], preferred_element_type=jnp.float32)
    h = _gelu(h + b1_ref[...], approx_gelu)
    # dropout(p=0.0) -> identity
    acc_ref[...] += jnp.dot(h.astype(w2_ref.dtype), w2_ref[...],
                            preferred_element_type=jnp.float32)

    @pl.when(k == pl.num_programs(1) - 1)
    def _():
        o_ref[...] = (acc_ref[...] + b2_ref[...]).astype(o_ref.dtype)
        # dropout(p=0.0) -> identity


# ---------------------------------------------------------------------------
# VMEM footprint helpers (double-buffered inputs/outputs + slabs)
# ---------------------------------------------------------------------------

def _resident_footprint(tm, d_in, d_hid, d_out, w_item, out_item):
    weights = 2 * (d_in * d_hid + d_hid * d_out) * w_item
    biases = 2 * 8 * (d_hid + d_out) * 4
    x_b = 2 * tm * d_in * w_item
    o_b = 2 * tm * d_out * out_item
    h_b = tm * d_hid * 4
    return weights + biases + x_b + o_b + h_b


def _chunked_footprint(tm, tk, d_in, d_out, w_item, out_item, use_scratch):
    x_b = 2 * tm * d_in * w_item
    w1_b = 2 * d_in * tk * w_item
    w2_b = 2 * tk * d_out * w_item
    b_b = 2 * 8 * (tk + d_out) * 4
    o_b = 2 * tm * d_out * out_item
    acc_b = tm * d_out * 4 if use_scratch else 0
    h_b = tm * tk * 4
    return x_b + w1_b + w2_b + b_b + o_b + acc_b + h_b


def _vmem_limit(footprint):
    return int(min(max(int(footprint * 1.4), _VMEM_FLOOR), _VMEM_CAP))


# ---------------------------------------------------------------------------
# Wrapper
# ---------------------------------------------------------------------------

def mlp_forward(x, w1, b1, w2, b2, *, tm=512, tk=512, compute_dtype=None,
                approx_gelu=False, resident=None):
    """x: [..., D_in] -> [..., D_out].  Weights stored as [D_in, D_hid] / [D_hid, D_out]."""
    orig_shape = x.shape
    D_in = orig_shape[-1]
    D_hid = w1.shape[1]
    D_out = w2.shape[1]
    N = int(math.prod(orig_shape[:-1]))

    out_dtype = x.dtype
    if compute_dtype is None:
        compute_dtype = jnp.result_type(x.dtype, w1.dtype, w2.dtype)
    compute_dtype = jnp.dtype(compute_dtype)
    out_itemsize = jnp.dtype(out_dtype).itemsize
    itemsize = compute_dtype.itemsize

    # Cast both dot operands to a single dtype at the wrapper (no silent in-kernel
    # promotion); biases are kept in f32 so bias adds always happen in f32.
    x2d = x.reshape(N, D_in).astype(compute_dtype)
    w1c = w1.astype(compute_dtype)
    w2c = w2.astype(compute_dtype)
    b1_2d = b1.reshape(1, D_hid).astype(jnp.float32)
    b2_2d = b2.reshape(1, D_out).astype(jnp.float32)

    # ---- feature-dim (lane) padding to multiples of 128 (exact: zero rows/cols) ----
    D_in_p = _round_up(D_in, 128)
    D_out_p = _round_up(D_out, 128)
    if D_in_p != D_in:
        x2d = jnp.pad(x2d, ((0, 0), (0, D_in_p - D_in)))
        w1c = jnp.pad(w1c, ((0, D_in_p - D_in), (0, 0)))
    if D_out_p != D_out:
        w2c = jnp.pad(w2c, ((0, 0), (0, D_out_p - D_out)))
        b2_2d = jnp.pad(b2_2d, ((0, 0), (0, D_out_p - D_out)))

    # ---- hidden tile ----
    tk = max(128, min(tk, _round_up(D_hid, 128)))
    tk = (tk // 128) * 128

    # ---- token tile: large (MXU / DMA friendly), but >= 2 tiles when there is enough
    #      work so the "parallel" axis can shard across both v7x TensorCores.
    N8 = _round_up(max(N, 1), 8)
    if N8 <= tm and N >= 256:
        tm = _round_up(-(-N // 2), 8)
    else:
        tm = max(8, min(tm, N8))

    # ---- path selection ----
    D_hid_res = _round_up(D_hid, 128)
    res_fp = _resident_footprint(tm, D_in_p, D_hid_res, D_out_p, itemsize, out_itemsize)
    use_resident = resident if resident is not None else (res_fp <= _RESIDENT_BUDGET)

    f32_out = jnp.dtype(out_dtype) == jnp.float32

    if use_resident:
        # Shrink tm if a forced-resident footprint is too large.
        while res_fp > _CHUNK_BUDGET and tm > 128:
            tm = max(128, _round_up(tm // 2, 8))
            res_fp = _resident_footprint(tm, D_in_p, D_hid_res, D_out_p, itemsize,
                                         out_itemsize)
        D_hid_p = D_hid_res
        vmem_bytes = _vmem_limit(res_fp)
    else:
        use_scratch = not f32_out
        while True:
            ch_fp = _chunked_footprint(tm, tk, D_in_p, D_out_p, itemsize, out_itemsize,
                                       use_scratch)
            if ch_fp <= _CHUNK_BUDGET or (tm <= 128 and tk <= 128):
                break
            if tm > 128:
                tm = max(128, _round_up(tm // 2, 8))
            else:
                tk = max(128, (tk // 2 // 128) * 128)
        D_hid_p = _round_up(D_hid, tk)
        vmem_bytes = _vmem_limit(ch_fp)

    # ---- hidden-dim padding (exact: gelu(0 + 0) = 0, padded w2 rows are zero) ----
    if D_hid_p != D_hid:
        w1c = jnp.pad(w1c, ((0, 0), (0, D_hid_p - D_hid)))
        b1_2d = jnp.pad(b1_2d, ((0, 0), (0, D_hid_p - D_hid)))
        w2c = jnp.pad(w2c, ((0, D_hid_p - D_hid), (0, 0)))

    # ---- token padding ----
    Npad = _round_up(max(N, 1), tm)
    if Npad != N:
        x2d = jnp.pad(x2d, ((0, Npad - N), (0, 0)))

    if use_resident:
        kernel = functools.partial(_mlp_kernel_resident, approx_gelu=approx_gelu)
        out2d = pl.pallas_call(
            kernel,
            out_shape=jax.ShapeDtypeStruct((Npad, D_out_p), out_dtype),
            grid_spec=pltpu.PrefetchScalarGridSpec(
                num_scalar_prefetch=0,
                grid=(Npad // tm,),
                in_specs=[
                    pl.BlockSpec((tm, D_in_p), lambda i: (i, 0)),
                    pl.BlockSpec((D_in_p, D_hid_p), lambda i: (0, 0)),   # resident
                    pl.BlockSpec((1, D_hid_p), lambda i: (0, 0)),        # resident
                    pl.BlockSpec((D_hid_p, D_out_p), lambda i: (0, 0)),  # resident
                    pl.BlockSpec((1, D_out_p), lambda i: (0, 0)),        # resident
                ],
                out_specs=pl.BlockSpec((tm, D_out_p), lambda i: (i, 0)),
            ),
            compiler_params=pltpu.CompilerParams(
                dimension_semantics=("parallel",),
                vmem_limit_bytes=vmem_bytes,
            ),
        )(x2d, w1c, b1_2d, w2c, b2_2d)
    else:
        if f32_out:
            kernel = functools.partial(_mlp_kernel_chunked_f32out, approx_gelu=approx_gelu)
            scratch = []
        else:
            kernel = functools.partial(_mlp_kernel_chunked_scratch, approx_gelu=approx_gelu)
            scratch = [pltpu.VMEM((tm, D_out_p), jnp.float32)]
        out2d = pl.pallas_call(
            kernel,
            out_shape=jax.ShapeDtypeStruct((Npad, D_out_p), out_dtype),
            grid_spec=pltpu.PrefetchScalarGridSpec(
                num_scalar_prefetch=0,
                grid=(Npad // tm, D_hid_p // tk),
                in_specs=[
                    pl.BlockSpec((tm, D_in_p), lambda i, k: (i, 0)),
                    pl.BlockSpec((D_in_p, tk), lambda i, k: (0, k)),
                    pl.BlockSpec((1, tk), lambda i, k: (0, k)),
                    pl.BlockSpec((tk, D_out_p), lambda i, k: (k, 0)),
                    pl.BlockSpec((1, D_out_p), lambda i, k: (0, 0)),
                ],
                out_specs=pl.BlockSpec((tm, D_out_p), lambda i, k: (i, 0)),
                scratch_shapes=scratch,
            ),
            compiler_params=pltpu.CompilerParams(
                dimension_semantics=("parallel", "arbitrary"),
                vmem_limit_bytes=vmem_bytes,
            ),
        )(x2d, w1c, b1_2d, w2c, b2_2d)

    return out2d[:N, :D_out].reshape(orig_shape[:-1] + (D_out,))


# ---------------------------------------------------------------------------
# Reference and test harness
# ---------------------------------------------------------------------------

def mlp_reference(x, w1, b1, w2, b2):
    h = jnp.einsum("bsd,dh->bsh", x, w1) + b1
    h = h * 0.5 * (1.0 + lax.erf(h * _INV_SQRT2))
    o = jnp.einsum("bsh,ho->bso", h, w2) + b2
    return o


def _make_params(key, d_in, d_hid, d_out):
    k_w1, k_b1, k_w2, k_b2 = jax.random.split(key, 4)
    bound1 = 1.0 / math.sqrt(d_in)
    w1 = jax.random.uniform(k_w1, (d_in, d_hid), jnp.float32, -bound1, bound1)
    b1 = jax.random.uniform(k_b1, (d_hid,), jnp.float32, -bound1, bound1)
    bound2 = 1.0 / math.sqrt(d_hid)
    w2 = jax.random.uniform(k_w2, (d_hid, d_out), jnp.float32, -bound2, bound2)
    b2 = jax.random.uniform(k_b2, (d_hid and d_out,), jnp.float32, -bound2, bound2)
    return w1, b1, w2, b2


if __name__ == "__main__":
    key = jax.random.PRNGKey(0)
    k0, k1, k2, kp0, kp1, kp2 = jax.random.split(key, 6)

    run_auto = jax.jit(mlp_forward)                                    # resident fast path
    run_chunked = jax.jit(functools.partial(mlp_forward, resident=False))  # chunked path

    # Test 1: small shapes (batch=2, seq=8, in=128, hidden=256, out=128) -> resident path
    B, S = 2, 8
    D_in, D_hid, D_out = 128, 256, 128
    x = jax.random.normal(k0, (B, S, D_in), dtype=jnp.float32)
    w1, b1, w2, b2 = _make_params(kp0, D_in, D_hid, D_out)
    out = run_auto(x, w1, b1, w2, b2)
    jax.block_until_ready(out)
    ref = mlp_reference(x, w1, b1, w2, b2)
    assert out.shape == (B, S, D_out)
    assert jnp.allclose(out, ref, atol=1e-4, rtol=1e-4), "mismatch vs reference (test 1)"

    # Test 2: chunked f32 path — multiple token tiles, non-128 hidden dim (padded),
    #         hidden-chunk accumulation directly into the f32 output block.
    B2, S2 = 2, 200                        # N = 400 -> tm = 200, 2 token tiles
    D_in2, D_hid2, D_out2 = 256, 900, 256  # D_hid padded to 1024 -> 2 hidden chunks (tk=512)
    x2 = jax.random.normal(k1, (B2, S2, D_in2), dtype=jnp.float32)
    w1b, b1b, w2b, b2b = _make_params(kp1, D_in2, D_hid2, D_out2)
    out2 = run_chunked(x2, w1b, b1b, w2b, b2b)
    jax.block_until_ready(out2)
    ref2 = mlp_reference(x2, w1b, b1b, w2b, b2b)
    assert out2.shape == (B2, S2, D_out2)
    assert jnp.allclose(out2, ref2, atol=1e-4, rtol=1e-4), "mismatch vs reference (test 2)"

    # Test 3: explicit bf16 MXU path (f32 accumulation), chunked with f32 scratch finalize.
    B3, S3 = 2, 64
    D_in3, D_hid3, D_out3 = 256, 768, 256
    x3 = jax.random.normal(k2, (B3, S3, D_in3), dtype=jnp.float32).astype(jnp.bfloat16)
    w1c_, b1c_, w2c_, b2c_ = _make_params(kp2, D_in3, D_hid3, D_out3)
    w1c_ = w1c_.astype(jnp.bfloat16)
    w2c_ = w2c_.astype(jnp.bfloat16)
    out3 = run_chunked(x3, w1c_, b1c_, w2c_, b2c_)
    jax.block_until_ready(out3)
    ref3 = mlp_reference(x3.astype(jnp.float32), w1c_.astype(jnp.float32), b1c_,
                         w2c_.astype(jnp.float32), b2c_)
    assert out3.shape == (B3, S3, D_out3)
    assert jnp.allclose(out3.astype(jnp.float32), ref3, atol=1e-1, rtol=1e-1), \
        "mismatch vs reference (test 3, bf16)"

    print("KERNEL_OK")
</pallas_src>

<mosaic_0001>
module attributes {stable_mosaic.version = 11 : i64} {
  func.func @_mlp_kernel_resident(%arg0: i32, %arg1: memref<16x128xf32, #tpu.memory_space<vmem>>, %arg2: memref<128x256xf32, #tpu.memory_space<vmem>>, %arg3: memref<1x256xf32, #tpu.memory_space<vmem>>, %arg4: memref<256x128xf32, #tpu.memory_space<vmem>>, %arg5: memref<1x128xf32, #tpu.memory_space<vmem>>, %arg6: memref<16x128xf32, #tpu.memory_space<vmem>>) attributes {dimension_semantics = [#tpu.dimension_semantics<parallel>], iteration_bounds = array<i64: 1>, scalar_prefetch = 0 : i64, scratch_operands = 0 : i64, tpu.core_type = #tpu.core_type<tc>, window_params = [{transform_indices = @transform_0, window_bounds = array<i64: 16, 128>}, {pipeline_mode = #tpu.pipeline_mode<synchronous>, transform_indices = @transform_1, window_bounds = array<i64: 128, 256>}, {pipeline_mode = #tpu.pipeline_mode<synchronous>, transform_indices = @transform_2, window_bounds = array<i64: 1, 256>}, {pipeline_mode = #tpu.pipeline_mode<synchronous>, transform_indices = @transform_3, window_bounds = array<i64: 256, 128>}, {pipeline_mode = #tpu.pipeline_mode<synchronous>, transform_indices = @transform_4, window_bounds = array<i64: 1, 128>}, {transform_indices = @transform_5, window_bounds = array<i64: 16, 128>}]} {
    %c0 = arith.constant 0 : index
    %c0_0 = arith.constant 0 : index
    %0 = vector.load %arg1[%c0, %c0_0] : memref<16x128xf32, #tpu.memory_space<vmem>>, vector<16x128xf32>
    %c0_1 = arith.constant 0 : index
    %c0_2 = arith.constant 0 : index
    %1 = vector.load %arg2[%c0_1, %c0_2] : memref<128x256xf32, #tpu.memory_space<vmem>>, vector<128x256xf32>
    %cst = arith.constant dense<0.000000e+00> : vector<16x256xf32>
    %2 = tpu.matmul %0, %1, %cst {dimension_numbers = #tpu.dot_dimension_numbers<[1], [0], [0], [1], [0, 0, 1, 1], [], []>} : vector<16x128xf32>, vector<128x256xf32>, vector<16x256xf32> -> vector<16x256xf32>
    %c0_3 = arith.constant 0 : index
    %c0_4 = arith.constant 0 : index
    %3 = vector.load %arg3[%c0_3, %c0_4] : memref<1x256xf32, #tpu.memory_space<vmem>>, vector<1x256xf32>
    %4 = vector.broadcast %3 : vector<1x256xf32> to vector<16x256xf32>
    %5 = arith.addf %2, %4 : vector<16x256xf32>
    %cst_5 = arith.constant 5.000000e-01 : f32
    %6 = vector.broadcast %cst_5 : f32 to vector<16x256xf32>
    %7 = arith.mulf %5, %6 : vector<16x256xf32>
    %cst_6 = arith.constant 0.707106769 : f32
    %8 = vector.broadcast %cst_6 : f32 to vector<16x256xf32>
    %9 = arith.mulf %5, %8 : vector<16x256xf32>
    %10 = math.erf %9 : vector<16x256xf32>
    %cst_7 = arith.constant 1.000000e+00 : f32
    %11 = vector.broadcast %cst_7 : f32 to vector<16x256xf32>
    %12 = arith.addf %11, %10 : vector<16x256xf32>
    %13 = arith.mulf %7, %12 : vector<16x256xf32>
    %c0_8 = arith.constant 0 : index
    %c0_9 = arith.constant 0 : index
    %14 = vector.load %arg4[%c0_8, %c0_9] : memref<256x128xf32, #tpu.memory_space<vmem>>, vector<256x128xf32>
    %cst_10 = arith.constant dense<0.000000e+00> : vector<16x128xf32>
    %15 = tpu.matmul %13, %14, %cst_10 {dimension_numbers = #tpu.dot_dimension_numbers<[1], [0], [0], [1], [0, 0, 1, 1], [], []>} : vector<16x256xf32>, vector<256x128xf32>, vector<16x128xf32> -> vector<16x128xf32>
    %c0_11 = arith.constant 0 : index
    %c0_12 = arith.constant 0 : index
    %16 = vector.load %arg5[%c0_11, %c0_12] : memref<1x128xf32, #tpu.memory_space<vmem>>, vector<1x128xf32>
    %17 = vector.broadcast %16 : vector<1x128xf32> to vector<16x128xf32>
    %18 = arith.addf %15, %17 : vector<16x128xf32>
    %c0_13 = arith.constant 0 : index
    %c0_14 = arith.constant 0 : index
    %19 = vector.load %arg6[%c0_13, %c0_14] : memref<16x128xf32, #tpu.memory_space<vmem>>, vector<16x128xf32>
    tpu.vector_store %arg6[%c0_13, %c0_14], %18 {strides = array<i32>} : memref<16x128xf32, #tpu.memory_space<vmem>>, vector<16x128xf32>,
    return
  }
  func.func @transform_0(%arg0: i32) -> (i32, i32) {
    %c0_i32 = arith.constant 0 : i32
    %c0_i32_0 = arith.constant 0 : i32
    return %arg0, %c0_i32 : i32, i32
  }
  func.func @transform_1(%arg0: i32) -> (i32, i32) {
    %c0_i32 = arith.constant 0 : i32
    %c0_i32_0 = arith.constant 0 : i32
    %c0_i32_1 = arith.constant 0 : i32
    return %c0_i32, %c0_i32_0 : i32, i32
  }
  func.func @transform_2(%arg0: i32) -> (i32, i32) {
    %c0_i32 = arith.constant 0 : i32
    %c0_i32_0 = arith.constant 0 : i32
    %c0_i32_1 = arith.constant 0 : i32
    return %c0_i32, %c0_i32_0 : i32, i32
  }
  func.func @transform_3(%arg0: i32) -> (i32, i32) {
    %c0_i32 = arith.constant 0 : i32
    %c0_i32_0 = arith.constant 0 : i32
    %c0_i32_1 = arith.constant 0 : i32
    return %c0_i32, %c0_i32_0 : i32, i32
  }
  func.func @transform_4(%arg0: i32) -> (i32, i32) {
    %c0_i32 = arith.constant 0 : i32
    %c0_i32_0 = arith.constant 0 : i32
    %c0_i32_1 = arith.constant 0 : i32
    return %c0_i32, %c0_i32_0 : i32, i32
  }
  func.func @transform_5(%arg0: i32) -> (i32, i32) {
    %c0_i32 = arith.constant 0 : i32
    %c0_i32_0 = arith.constant 0 : i32
    return %arg0, %c0_i32 : i32, i32
  }
}

</mosaic_0001>

<llo_original>
// kernel: mlp_forward.1
$region0: #{mlp_forward.1}
  #allocation0 [shape = 'u32[]', space=smem, size = 0x4, offset = 0x4, fixed_abs, tag = 'smem constant byte address 0x4 - core index']
  #allocation1 [shape = 'u32[144,128]{1,0:T(1,128)}', space=vmem, size = 0x12000, scoped, tag = 'internal scratch']
  %s0 = inlined_call_operand.hbm [shape: f32[16,128], index: 0, kind: input, shape index: {}]
  %s1 = inlined_call_operand.hbm [shape: f32[128,256], index: 1, kind: input, shape index: {}]
  %s2 = inlined_call_operand.vmem [shape: f32[1,256], index: 2, kind: input, shape index: {}]
  %s3 = inlined_call_operand.hbm [shape: f32[256,128], index: 3, kind: input, shape index: {}]
  %s4 = inlined_call_operand.vmem [shape: f32[1,128], index: 4, kind: input, shape index: {}]
  %s5 = inlined_call_operand.hbm [shape: f32[16,128], index: 5, kind: output, shape index: {}]
  %s6 = sld [smem:[#allocation0]]
  $region42: #{mlp_forward.1} parent=0
    _
  %s8 = ssub.s32 1, %s6
  %s9 = scalar_select 0, %s8, %s6
  $region1: #{mlp_forward.1} parent=0
    #allocation2 [shape = 'u8[8192]{0}', space=vmem, size = 0x2000, scoped, tag = 'input window, operand 0, single buffered']
    #allocation3 [shape = 's32[1]{0}', space=sflag, size = 0x4, scoped, tag = 'scoped memory for mlp_forward.1']
    #allocation4 [shape = 's32[1]{0}', space=sflag, size = 0x4, scoped, tag = 'scoped memory for mlp_forward.1']
    #allocation5 [shape = 'u8[131072]{0}', space=vmem, size = 0x20000, scoped, tag = 'input window, operand 1, single buffered']
    #allocation6 [shape = 's32[1]{0}', space=sflag, size = 0x4, scoped, tag = 'scoped memory for mlp_forward.1']
    #allocation7 [shape = 'u8[131072]{0}', space=vmem, size = 0x20000, scoped, tag = 'input window, operand 3, single buffered']
    #allocation8 [shape = 'u8[8192]{0}', space=vmem, size = 0x2000, scoped, tag = 'output window, operand 0, single buffered']
    %10 = vsyncpa [#allocation3], 0
    %11 = vsyncpa [#allocation6], 0
    %12 = vsyncpa [#allocation4], 0
    // Predicated region
    $region2: #{mlp_forward.1} parent=1 // pred_check
      _
    $region3: #{mlp_forward.1} parent=1 // pred_check_branch
      %14 = sbr.rel (0) target = $region5
    $region4: #{mlp_forward.1} parent=1 // pred_region
      %s16 = ssub.s32 256, 256
      %17 = vsyncadd [#allocation3], %s16
      %s18 = sshll.u32 [#allocation2], 4
      %s19 = int_to_ptr.vmem [resolvable:$true] %s18
      %24 = dma.hbm_to_vmem [thread:$0]  %s0, 256, %s19, [#allocation3], 128, 128, 8
    $region5: #{mlp_forward.1} parent=1 // pred_fallthru
      _
    // Predicated region
    $region6: #{mlp_forward.1} parent=1 // pred_check
      _
    $region7: #{mlp_forward.1} parent=1 // pred_check_branch
      %26 = sbr.rel (0) target = $region9
    $region8: #{mlp_forward.1} parent=1 // pred_region
      %s28 = ssub.s32 4096, 4096
      %29 = vsyncadd [#allocation6], %s28
      %s30 = sshll.u32 [#allocation5], 4
      %s31 = int_to_ptr.vmem [resolvable:$true] %s30
      %36 = dma.hbm_to_vmem [thread:$0]  %s1, 4096, %s31, [#allocation6], 256, 256, 16
    $region9: #{mlp_forward.1} parent=1 // pred_fallthru
      _
    // Predicated region
    $region10: #{mlp_forward.1} parent=1 // pred_check
      _
    $region11: #{mlp_forward.1} parent=1 // pred_check_branch
      %38 = sbr.rel (0) target = $region13
    $region12: #{mlp_forward.1} parent=1 // pred_region
      _
    $region13: #{mlp_forward.1} parent=1 // pred_fallthru
      _
    // Predicated region
    $region14: #{mlp_forward.1} parent=1 // pred_check
      _
    $region15: #{mlp_forward.1} parent=1 // pred_check_branch
      %40 = sbr.rel (0) target = $region17
    $region16: #{mlp_forward.1} parent=1 // pred_region
      %s42 = ssub.s32 4096, 4096
      %43 = vsyncadd [#allocation6], %s42
      %s44 = sshll.u32 [#allocation7], 4
      %s45 = int_to_ptr.vmem [resolvable:$true] %s44
      %50 = dma.hbm_to_vmem [thread:$0]  %s3, 4096, %s45, [#allocation6], 128, 128, 8
    $region17: #{mlp_forward.1} parent=1 // pred_fallthru
      _
    // Predicated region
    $region18: #{mlp_forward.1} parent=1 // pred_check
      _
    $region19: #{mlp_forward.1} parent=1 // pred_check_branch
      %52 = sbr.rel (0) target = $region21
    $region20: #{mlp_forward.1} parent=1 // pred_region
      _
    $region21: #{mlp_forward.1} parent=1 // pred_fallthru
      _
    // Predicated region
    $region22: #{mlp_forward.1} parent=1 // pred_check
      _
    $region23: #{mlp_forward.1} parent=1 // pred_check_branch
      %54 = sbr.rel (0) target = $region25
    $region24: #{mlp_forward.1} parent=1 // pred_region
      %55 = dma.done [#allocation3], 256
    $region25: #{mlp_forward.1} parent=1 // pred_fallthru
      _
    // Predicated region
    $region26: #{mlp_forward.1} parent=1 // pred_check
      _
    $region27: #{mlp_forward.1} parent=1 // pred_check_branch
      %57 = sbr.rel (0) target = $region29
    $region28: #{mlp_forward.1} parent=1 // pred_region
      %58 = dma.done [#allocation6], 4096
    $region29: #{mlp_forward.1} parent=1 // pred_fallthru
      _
    // Predicated region
    $region30: #{mlp_forward.1} parent=1 // pred_check
      _
    $region31: #{mlp_forward.1} parent=1 // pred_check_branch
      %60 = sbr.rel (0) target = $region33
    $region32: #{mlp_forward.1} parent=1 // pred_region
      %61 = dma.done [#allocation6], 4096
    $region33: #{mlp_forward.1} parent=1 // pred_fallthru
      _
    %v62 = vld [vmem:[#allocation2] sm:$0xff]
    %v63 = vld [vmem:[#allocation2 + $0x8] sm:$0xff]
    %v64 = vld [vmem:[#allocation5] sm:$0xff]
    %v65 = vld [vmem:[#allocation5 + $0x8] sm:$0xff]
    %v66 = vld [vmem:[#allocation5 + $0x10] sm:$0xff]
    %v67 = vld [vmem:[#allocation5 + $0x18] sm:$0xff]
    %v68 = vld [vmem:[#allocation5 + $0x20] sm:$0xff]
    %v69 = vld [vmem:[#allocation5 + $0x28] sm:$0xff]
    %v70 = vld [vmem:[#allocation5 + $0x30] sm:$0xff]
    %v71 = vld [vmem:[#allocation5 + $0x38] sm:$0xff]
    %v72 = vld [vmem:[#allocation5 + $0x40] sm:$0xff]
    %v73 = vld [vmem:[#allocation5 + $0x48] sm:$0xff]
    %v74 = vld [vmem:[#allocation5 + $0x50] sm:$0xff]
    %v75 = vld [vmem:[#allocation5 + $0x58] sm:$0xff]
    %v76 = vld [vmem:[#allocation5 + $0x60] sm:$0xff]
    %v77 = vld [vmem:[#allocation5 + $0x68] sm:$0xff]
    %v78 = vld [vmem:[#allocation5 + $0x70] sm:$0xff]
    %v79 = vld [vmem:[#allocation5 + $0x78] sm:$0xff]
    %v80 = vld [vmem:[#allocation5 + $0x80] sm:$0xff]
    %v81 = vld [vmem:[#allocation5 + $0x88] sm:$0xff]
    %v82 = vld [vmem:[#allocation5 + $0x90] sm:$0xff]
    %v83 = vld [vmem:[#allocation5 + $0x98] sm:$0xff]
    %v84 = vld [vmem:[#allocation5 + $0xa0] sm:$0xff]
    %v85 = vld [vmem:[#allocation5 + $0xa8] sm:$0xff]
    %v86 = vld [vmem:[#allocation5 + $0xb0] sm:$0xff]
    %v87 = vld [vmem:[#allocation5 + $0xb8] sm:$0xff]
    %v88 = vld [vmem:[#allocation5 + $0xc0] sm:$0xff]
    %v89 = vld [vmem:[#allocation5 + $0xc8] sm:$0xff]
    %v90 = vld [vmem:[#allocation5 + $0xd0] sm:$0xff]
    %v91 = vld [vmem:[#allocation5 + $0xd8] sm:$0xff]
    %v92 = vld [vmem:[#allocation5 + $0xe0] sm:$0xff]
    %v93 = vld [vmem:[#allocation5 + $0xe8] sm:$0xff]
    %v94 = vld [vmem:[#allocation5 + $0xf0] sm:$0xff]
    %v95 = vld [vmem:[#allocation5 + $0xf8] sm:$0xff]
    %v96 = vld [vmem:[%s2] sm:$0x3]
    %v98 = vlaneseq
    %v99 = vshrl.u32 %v98, 7
    %v100 = vsub.s32 0, %v99
    %v101 = vrot.slane %v96, %v100
    %v102 = vlaneseq
    %v103 = vshrl.u32 %v102, 7
    %v104 = vsub.s32 1, %v103
    %v105 = vrot.slane %v96, %v104
    %108 = vmatprep.subr.mxu0 %v95
    %109 = vmatpush1.msra.mxu0 %v94
    %110 = vmatprep.subr.mxu0 %v93
    %111 = vmatpush1.msra.mxu0 %v92
    %112 = vmatprep.subr.mxu0 %v91
    %113 = vmatpush1.msra.mxu0 %v90
    %114 = vmatprep.subr.mxu0 %v89
    %115 = vmatpush1.msra.mxu0 %v88
    %116 = vmatprep.subr.mxu0 %v87
    %117 = vmatpush1.msra.mxu0 %v86
    %118 = vmatprep.subr.mxu0 %v85
    %119 = vmatpush1.msra.mxu0 %v84
    %120 = vmatprep.subr.mxu0 %v83
    %121 = vmatpush1.msra.mxu0 %v82
    %122 = vmatprep.subr.mxu0 %v81
    %123 = vmatpush1.msra.mxu0 %v80
    %124 = vmatprep.subr.mxu0 %v79
    %125 = vmatpush1.msra.mxu0 %v78
    %126 = vmatprep.subr.mxu0 %v77
    %127 = vmatpush1.msra.mxu0 %v76
    %128 = vmatprep.subr.mxu0 %v75
    %129 = vmatpush1.msra.mxu0 %v74
    %130 = vmatprep.subr.mxu0 %v73
    %131 = vmatpush1.msra.mxu0 %v72
    %132 = vmatprep.subr.mxu0 %v71
    %133 = vmatpush1.msra.mxu0 %v70
    %134 = vmatprep.subr.mxu0 %v69
    %135 = vmatpush1.msra.mxu0 %v68
    %136 = vmatprep.subr.mxu0 %v67
    %137 = vmatpush1.msra.mxu0 %v66
    %138 = vmatprep.subr.mxu0 %v65
    %139 = vmatpush1.msra.mxu0 %v64
    %140 = vmatprep.subr.mxu0 0.0
    %141 = vmatpush2.msra.mxu0 0.0
    %142 = vmatprep.subr.mxu0 0.0
    %143 = vmatpush2.msra.mxu0 0.0
    %144 = vmatprep.subr.mxu0 0.0
    %145 = vmatpush2.msra.mxu0 0.0
    %146 = vmatprep.subr.mxu0 0.0
    %147 = vmatpush2.msra.mxu0 0.0
    %148 = vmatprep.subr.mxu0 0.0
    %149 = vmatpush2.msra.mxu0 0.0
    %150 = vmatprep.subr.mxu0 0.0
    %151 = vmatpush2.msra.mxu0 0.0
    %152 = vmatprep.subr.mxu0 0.0
    %153 = vmatpush2.msra.mxu0 0.0
    %154 = vmatprep.subr.mxu0 0.0
    %155 = vmatpush2.msra.mxu0 0.0
    %156 = vmatprep.subr.mxu0 0.0
    %157 = vmatpush2.msra.mxu0 0.0
    %158 = vmatprep.subr.mxu0 0.0
    %159 = vmatpush2.msra.mxu0 0.0
    %160 = vmatprep.subr.mxu0 0.0
    %161 = vmatpush2.msra.mxu0 0.0
    %162 = vmatprep.subr.mxu0 0.0
    %163 = vmatpush2.msra.mxu0 0.0
    %164 = vmatprep.subr.mxu0 0.0
    %165 = vmatpush2.msra.mxu0 0.0
    %166 = vmatprep.subr.mxu0 0.0
    %167 = vmatpush2.msra.mxu0 0.0
    %168 = vmatprep.subr.mxu0 0.0
    %169 = vmatpush2.msra.mxu0 0.0
    %170 = vmatprep.subr.mxu0 0.0
    %171 = vmatpush2.msra.mxu0 0.0
    %172 = vmatprep.mubr.f32.mxu0 0.0
    %173 = vmatmul.mubr.f32.gmra.mxu0 %v62
    %v174 = vpop.f32.mrf.mxu0
    %v175 = vadd.f32 %v101, %v174
    %v176 = vpop.f32.mrf.mxu0
    %v177 = vadd.f32 %v105, %v176
    %178 = vmatprep.mubr.f32.mxu0 0.0
    %179 = vmatmul.mubr.f32.gmra.mxu0 %v63
    %v180 = vpop.f32.mrf.mxu0
    %v181 = vadd.f32 %v101, %v180
    %v182 = vpop.f32.mrf.mxu0
    %v183 = vadd.f32 %v105, %v182
    %184 = vdwg.mxu0
    %v185 = vmul.f32 %v175, 0.5
    %v186 = vmul.f32 %v177, 0.5
    %v187 = vmul.f32 %v181, 0.5
    %v188 = vmul.f32 %v183, 0.5
    %v189 = vmul.f32 %v175, 0.70710677
    %v190 = vmul.f32 %v177, 0.70710677
    %v191 = vmul.f32 %v181, 0.70710677
    %v192 = vmul.f32 %v183, 0.70710677
    %v193 = verf.f32.pop %v189
    %v194 = verf.f32.pop %v190
    %v195 = verf.f32.pop %v191
    %v196 = verf.f32.pop %v192
    %v197 = vadd.f32 %v193, 1.0
    %v198 = vadd.f32 %v194, 1.0
    %v199 = vadd.f32 %v195, 1.0
    %v200 = vadd.f32 %v196, 1.0
    %v201 = vmul.f32 %v185, %v197
    %v202 = vmul.f32 %v186, %v198
    %v203 = vmul.f32 %v187, %v199
    %v204 = vmul.f32 %v188, %v200
    %v205 = vld [vmem:[#allocation7] sm:$0xff]
    %v206 = vld [vmem:[#allocation7 + $0x8] sm:$0xff]
    %v207 = vld [vmem:[#allocation7 + $0x10] sm:$0xff]
    %v208 = vld [vmem:[#allocation7 + $0x18] sm:$0xff]
    %v209 = vld [vmem:[#allocation7 + $0x20] sm:$0xff]
    %v210 = vld [vmem:[#allocation7 + $0x28] sm:$0xff]
    %v211 = vld [vmem:[#allocation7 + $0x30] sm:$0xff]
    %v212 = vld [vmem:[#allocation7 + $0x38] sm:$0xff]
    %v213 = vld [vmem:[#allocation7 + $0x40] sm:$0xff]
    %v214 = vld [vmem:[#allocation7 + $0x48] sm:$0xff]
    %v215 = vld [vmem:[#allocation7 + $0x50] sm:$0xff]
    %v216 = vld [vmem:[#allocation7 + $0x58] sm:$0xff]
    %v217 = vld [vmem:[#allocation7 + $0x60] sm:$0xff]
    %v218 = vld [vmem:[#allocation7 + $0x68] sm:$0xff]
    %v219 = vld [vmem:[#allocation7 + $0x70] sm:$0xff]
    %v220 = vld [vmem:[#allocation7 + $0x78] sm:$0xff]
    %v221 = vld [vmem:[#allocation7 + $0x80] sm:$0xff]
    %v222 = vld [vmem:[#allocation7 + $0x88] sm:$0xff]
    %v223 = vld [vmem:[#allocation7 + $0x90] sm:$0xff]
    %v224 = vld [vmem:[#allocation7 + $0x98] sm:$0xff]
    %v225 = vld [vmem:[#allocation7 + $0xa0] sm:$0xff]
    %v226 = vld [vmem:[#allocation7 + $0xa8] sm:$0xff]
    %v227 = vld [vmem:[#allocation7 + $0xb0] sm:$0xff]
    %v228 = vld [vmem:[#allocation7 + $0xb8] sm:$0xff]
    %v229 = vld [vmem:[#allocation7 + $0xc0] sm:$0xff]
    %v230 = vld [vmem:[#allocation7 + $0xc8] sm:$0xff]
    %v231 = vld [vmem:[#allocation7 + $0xd0] sm:$0xff]
    %v232 = vld [vmem:[#allocation7 + $0xd8] sm:$0xff]
    %v233 = vld [vmem:[#allocation7 + $0xe0] sm:$0xff]
    %v234 = vld [vmem:[#allocation7 + $0xe8] sm:$0xff]
    %v235 = vld [vmem:[#allocation7 + $0xf0] sm:$0xff]
    %v236 = vld [vmem:[#allocation7 + $0xf8] sm:$0xff]
    %v237 = vld [vmem:[%s4] sm:$0x1]
    %v239 = vlaneseq
    %v240 = vshrl.u32 %v239, 7
    %v241 = vsub.s32 0, %v240
    %v242 = vrot.slane %v237, %v241
    %244 = vmatprep.subr.mxu0 0.0
    %245 = vmatpush1.msra.mxu0 %v220
    %246 = vmatprep.subr.mxu0 0.0
    %247 = vmatpush1.msra.mxu0 %v219
    %248 = vmatprep.subr.mxu0 0.0
    %249 = vmatpush1.msra.mxu0 %v218
    %250 = vmatprep.subr.mxu0 0.0
    %251 = vmatpush1.msra.mxu0 %v217
    %252 = vmatprep.subr.mxu0 0.0
    %253 = vmatpush1.msra.mxu0 %v216
    %254 = vmatprep.subr.mxu0 0.0
    %255 = vmatpush1.msra.mxu0 %v215
    %256 = vmatprep.subr.mxu0 0.0
    %257 = vmatpush1.msra.mxu0 %v214
    %258 = vmatprep.subr.mxu0 0.0
    %259 = vmatpush1.msra.mxu0 %v213
    %260 = vmatprep.subr.mxu0 0.0
    %261 = vmatpush1.msra.mxu0 %v212
    %262 = vmatprep.subr.mxu0 0.0
    %263 = vmatpush1.msra.mxu0 %v211
    %264 = vmatprep.subr.mxu0 0.0
    %265 = vmatpush1.msra.mxu0 %v210
    %266 = vmatprep.subr.mxu0 0.0
    %267 = vmatpush1.msra.mxu0 %v209
    %268 = vmatprep.subr.mxu0 0.0
    %269 = vmatpush1.msra.mxu0 %v208
    %270 = vmatprep.subr.mxu0 0.0
    %271 = vmatpush1.msra.mxu0 %v207
    %272 = vmatprep.subr.mxu0 0.0
    %273 = vmatpush1.msra.mxu0 %v206
    %274 = vmatprep.subr.mxu0 0.0
    %275 = vmatpush1.msra.mxu0 %v205
    %276 = vmatprep.subr.mxu0 0.0
    %277 = vmatpush2.msra.mxu0 %v236
    %278 = vmatprep.subr.mxu0 0.0
    %279 = vmatpush2.msra.mxu0 %v235
    %280 = vmatprep.subr.mxu0 0.0
    %281 = vmatpush2.msra.mxu0 %v234
    %282 = vmatprep.subr.mxu0 0.0
    %283 = vmatpush2.msra.mxu0 %v233
    %284 = vmatprep.subr.mxu0 0.0
    %285 = vmatpush2.msra.mxu0 %v232
    %286 = vmatprep.subr.mxu0 0.0
    %287 = vmatpush2.msra.mxu0 %v231
    %288 = vmatprep.subr.mxu0 0.0
    %289 = vmatpush2.msra.mxu0 %v230
    %290 = vmatprep.subr.mxu0 0.0
    %291 = vmatpush2.msra.mxu0 %v229
    %292 = vmatprep.subr.mxu0 0.0
    %293 = vmatpush2.msra.mxu0 %v228
    %294 = vmatprep.subr.mxu0 0.0
    %295 = vmatpush2.msra.mxu0 %v227
    %296 = vmatprep.subr.mxu0 0.0
    %297 = vmatpush2.msra.mxu0 %v226
    %298 = vmatprep.subr.mxu0 0.0
    %299 = vmatpush2.msra.mxu0 %v225
    %300 = vmatprep.subr.mxu0 0.0
    %301 = vmatpush2.msra.mxu0 %v224
    %302 = vmatprep.subr.mxu0 0.0
    %303 = vmatpush2.msra.mxu0 %v223
    %304 = vmatprep.subr.mxu0 0.0
    %305 = vmatpush2.msra.mxu0 %v222
    %306 = vmatprep.subr.mxu0 0.0
    %307 = vmatpush2.msra.mxu0 %v221
    %308 = vmatprep.mubr.f32.mxu0 %v202
    %309 = vmatmul.mubr.f32.gmra.mxu0 %v201
    %v310 = vpop.f32.mrf.mxu0
    %v311 = vadd.f32 %v242, %v310
    %v312 = vpop.f32.mrf.mxu0
    %313 = vmatprep.mubr.f32.mxu0 %v204
    %314 = vmatmul.mubr.f32.gmra.mxu0 %v203
    %v315 = vpop.f32.mrf.mxu0
    %v316 = vadd.f32 %v242, %v315
    %v317 = vpop.f32.mrf.mxu0
    %318 = vdwg.mxu0
    %319 = vst [vmem:[#allocation8] sm:$0xff] %v311
    %320 = vst [vmem:[#allocation8 + $0x8] sm:$0xff] %v316
    // Predicated region
    $region34: #{mlp_forward.1} parent=1 // pred_check
      _
    $region35: #{mlp_forward.1} parent=1 // pred_check_branch
      %322 = sbr.rel (0) target = $region37
    $region36: #{mlp_forward.1} parent=1 // pred_region
      %s324 = ssub.s32 256, 256
      %325 = vsyncadd [#allocation4], %s324
      %s326 = sshll.u32 [#allocation8], 4
      %s327 = int_to_ptr.vmem [resolvable:$true] %s326
      %332 = dma.vmem_to_hbm [thread:$0]  %s327, 256, %s5, [#allocation4], 128, 128, 8
    $region37: #{mlp_forward.1} parent=1 // pred_fallthru
      _
    // Predicated region
    $region38: #{mlp_forward.1} parent=1 // pred_check
      _
    $region39: #{mlp_forward.1} parent=1 // pred_check_branch
      %334 = sbr.rel (0) target = $region41
    $region40: #{mlp_forward.1} parent=1 // pred_region
      %335 = dma.done [#allocation4], 256
    $region41: #{mlp_forward.1} parent=1 // pred_fallthru
      _
    %336 = vsyncpa [#allocation3], 1
    %337 = vsyncpa [#allocation6], 1
    %338 = vsyncpa [#allocation4], 1

</llo_original>
